<compile_context>
chip_gen: v7x
topology: tpu7x:2x2x1
jax: 0.10.0
libtpu: 0.0.40
codegen_flags: <defaults>
</compile_context>

<pallas_src>
import jax
import jax.numpy as jnp
import numpy as np
from jax.experimental import pallas as pl
from jax.experimental.pallas import tpu as pltpu

LANE = 128


def _round_up(n, m):
    return ((n + m - 1) // m) * m


def _cdiv(a, b):
    return (a + b - 1) // b


def actor_kernel(x_ref,
                 w1_ref, b1_ref,
                 w2_ref, b2_ref,
                 w3_ref, b3_ref,
                 w4_ref, b4_ref,
                 wh_ref, bh_ref,
                 out_ref):
    """Fused MLP: 4x (Linear + ReLU) -> Linear head -> clamp(-10, 10).

    Matmuls in bf16 on the MXU with fp32 accumulation; bias/ReLU/clip in fp32
    on the VPU.  Dropout(p=0.1) is identity in eval mode.
    """
    def layer(h_bf16, w_ref, b_ref):
        acc = jnp.dot(h_bf16, w_ref[...], preferred_element_type=jnp.float32)
        return acc + b_ref[...]  # (1, N) bias broadcasts over the row tile

    h = jnp.maximum(layer(x_ref[...], w1_ref, b1_ref), 0.0).astype(jnp.bfloat16)
    h = jnp.maximum(layer(h, w2_ref, b2_ref), 0.0).astype(jnp.bfloat16)
    h = jnp.maximum(layer(h, w3_ref, b3_ref), 0.0).astype(jnp.bfloat16)
    h = jnp.maximum(layer(h, w4_ref, b4_ref), 0.0).astype(jnp.bfloat16)
    logits = layer(h, wh_ref, bh_ref)
    out_ref[...] = jnp.clip(logits, -10.0, 10.0).astype(out_ref.dtype)


def prepare_params(params):
    """One-time cast/pad of parameters (hoisted out of the forward call).

    Weights are stored [in, out] so the kernel computes x @ W + b.  The action
    head is padded to a lane-dense 128-wide output slab.
    """
    state_dim, hidden_dim = params["w1"].shape
    action_dim = params["wh"].shape[1]
    assert hidden_dim % LANE == 0, "hidden_dim must be a multiple of 128"
    n_pad = _round_up(action_dim, LANE)

    wh = jnp.zeros((hidden_dim, n_pad), jnp.bfloat16).at[:, :action_dim].set(
        params["wh"].astype(jnp.bfloat16))
    bh = jnp.zeros((1, n_pad), jnp.float32).at[:, :action_dim].set(
        params["bh"].astype(jnp.float32))

    return {
        "state_dim": state_dim,
        "hidden_dim": hidden_dim,
        "action_dim": action_dim,
        "n_pad": n_pad,
        "w1": params["w1"].astype(jnp.bfloat16),
        "w2": params["w2"].astype(jnp.bfloat16),
        "w3": params["w3"].astype(jnp.bfloat16),
        "w4": params["w4"].astype(jnp.bfloat16),
        "wh": wh,
        "b1": params["b1"].astype(jnp.float32),
        "b2": params["b2"].astype(jnp.float32),
        "b3": params["b3"].astype(jnp.float32),
        "b4": params["b4"].astype(jnp.float32),
        "bh": bh,
    }


def discrete_actor_forward(x, prep, *, block_m=1024, trim=True):
    """Run the fused kernel over batch tiles.

    trim=True slices back to (B, action_dim); trim=False returns the padded
    (b_pad, 128) bf16 slab (consumer must ignore cols >= action_dim and rows
    >= B), saving one more HBM round trip.
    """
    B, state_dim = x.shape
    assert state_dim == prep["state_dim"]
    hidden_dim = prep["hidden_dim"]
    n_pad = prep["n_pad"]

    # --- adaptive batch tiling: few big tiles, minimal dead-row padding, and
    # an even block count (>=2) when B is big enough to split across 2 TCs.
    n_blocks = max(1, _cdiv(B, block_m))
    if n_blocks == 1 and B >= 256:
        n_blocks = 2                       # let v7x megacore split the batch
    if n_blocks > 1 and n_blocks % 2:
        n_blocks += 1                      # balanced split across 2 cores
    tm = _round_up(_cdiv(B, n_blocks), 8)
    b_pad = tm * n_blocks

    xp = x.astype(jnp.bfloat16)
    if b_pad != B:
        xp = jnp.zeros((b_pad, state_dim), jnp.bfloat16).at[:B, :].set(xp)

    def resident(shape):
        # Same block every grid step -> parameters stay in VMEM, no re-DMA.
        return pl.BlockSpec(shape, lambda i: (0, 0))

    in_specs = [
        pl.BlockSpec((tm, state_dim), lambda i: (i, 0)),       # x tile
        resident((state_dim, hidden_dim)), resident((1, hidden_dim)),
        resident((hidden_dim, hidden_dim)), resident((1, hidden_dim)),
        resident((hidden_dim, hidden_dim)), resident((1, hidden_dim)),
        resident((hidden_dim, hidden_dim)), resident((1, hidden_dim)),
        resident((hidden_dim, n_pad)), resident((1, n_pad)),
    ]

    out_padded = pl.pallas_call(
        actor_kernel,
        out_shape=jax.ShapeDtypeStruct((b_pad, n_pad), jnp.bfloat16),
        grid=(n_blocks,),
        in_specs=in_specs,
        out_specs=pl.BlockSpec((tm, n_pad), lambda i: (i, 0)),
        compiler_params=pltpu.CompilerParams(
            dimension_semantics=("parallel",)),
    )(xp, prep["w1"], prep["b1"], prep["w2"], prep["b2"],
      prep["w3"], prep["b3"], prep["w4"], prep["b4"],
      prep["wh"], prep["bh"])

    if trim:
        return out_padded[:B, :prep["action_dim"]]
    return out_padded


def init_params(key, state_dim, action_dim, hidden_dim=128):
    """PyTorch nn.Linear default init (uniform(+-1/sqrt(fan_in))), weights
    stored [in, out] so the kernel computes x @ W + b directly."""
    dims = [(state_dim, hidden_dim),
            (hidden_dim, hidden_dim),
            (hidden_dim, hidden_dim),
            (hidden_dim, hidden_dim),
            (hidden_dim, action_dim)]
    names = ["1", "2", "3", "4", "h"]
    params = {}
    for (fan_in, fan_out), name in zip(dims, names):
        key, kw, kb = jax.random.split(key, 3)
        bound = 1.0 / np.sqrt(fan_in)
        params[f"w{name}"] = jax.random.uniform(
            kw, (fan_in, fan_out), jnp.float32, -bound, bound)
        params[f"b{name}"] = jax.random.uniform(
            kb, (1, fan_out), jnp.float32, -bound, bound)
    return params


def reference_forward(x, params):
    """Pure-JAX fp32 reference (eval mode: dropout = identity)."""
    h = jnp.maximum(x @ params["w1"] + params["b1"], 0.0)
    h = jnp.maximum(h @ params["w2"] + params["b2"], 0.0)
    h = jnp.maximum(h @ params["w3"] + params["b3"], 0.0)
    h = jnp.maximum(h @ params["w4"] + params["b4"], 0.0)
    logits = h @ params["wh"] + params["bh"]
    return jnp.clip(logits, -10.0, 10.0)


if __name__ == "__main__":
    key = jax.random.PRNGKey(0)

    batch = 8
    state_dim = 32
    action_dim = 8
    hidden_dim = 128

    key, kx = jax.random.split(key)
    x = jax.random.normal(kx, (batch, state_dim), jnp.float32)

    params = init_params(key, state_dim, action_dim, hidden_dim)
    prep = jax.tree_util.tree_map(
        lambda v: jax.block_until_ready(v) if isinstance(v, jax.Array) else v,
        prepare_params(params))  # one-time prep, outside the forward path

    out = discrete_actor_forward(x, prep)
    out = jax.block_until_ready(out)

    ref = reference_forward(x, params)
    # bf16 matmuls (fp32 accumulation) + bf16 output vs fp32 reference:
    # loose tolerance is expected and documented for downstream consumers.
    np.testing.assert_allclose(np.asarray(out.astype(jnp.float32)),
                               np.asarray(ref), rtol=5e-2, atol=5e-2)

    print("KERNEL_OK")
</pallas_src>

<mosaic_0001>
module attributes {stable_mosaic.version = 11 : i64} {
  func.func @actor_kernel(%arg0: i32, %arg1: memref<8x32xbf16, #tpu.memory_space<vmem>>, %arg2: memref<32x128xbf16, #tpu.memory_space<vmem>>, %arg3: memref<1x128xf32, #tpu.memory_space<vmem>>, %arg4: memref<128x128xbf16, #tpu.memory_space<vmem>>, %arg5: memref<1x128xf32, #tpu.memory_space<vmem>>, %arg6: memref<128x128xbf16, #tpu.memory_space<vmem>>, %arg7: memref<1x128xf32, #tpu.memory_space<vmem>>, %arg8: memref<128x128xbf16, #tpu.memory_space<vmem>>, %arg9: memref<1x128xf32, #tpu.memory_space<vmem>>, %arg10: memref<128x128xbf16, #tpu.memory_space<vmem>>, %arg11: memref<1x128xf32, #tpu.memory_space<vmem>>, %arg12: memref<8x128xbf16, #tpu.memory_space<vmem>>) attributes {dimension_semantics = [#tpu.dimension_semantics<parallel>], iteration_bounds = array<i64: 1>, scalar_prefetch = 0 : i64, scratch_operands = 0 : i64, tpu.core_type = #tpu.core_type<tc>, window_params = [{transform_indices = @transform_0, window_bounds = array<i64: 8, 32>}, {pipeline_mode = #tpu.pipeline_mode<synchronous>, transform_indices = @transform_1, window_bounds = array<i64: 32, 128>}, {pipeline_mode = #tpu.pipeline_mode<synchronous>, transform_indices = @transform_2, window_bounds = array<i64: 1, 128>}, {pipeline_mode = #tpu.pipeline_mode<synchronous>, transform_indices = @transform_3, window_bounds = array<i64: 128, 128>}, {pipeline_mode = #tpu.pipeline_mode<synchronous>, transform_indices = @transform_4, window_bounds = array<i64: 1, 128>}, {pipeline_mode = #tpu.pipeline_mode<synchronous>, transform_indices = @transform_5, window_bounds = array<i64: 128, 128>}, {pipeline_mode = #tpu.pipeline_mode<synchronous>, transform_indices = @transform_6, window_bounds = array<i64: 1, 128>}, {pipeline_mode = #tpu.pipeline_mode<synchronous>, transform_indices = @transform_7, window_bounds = array<i64: 128, 128>}, {pipeline_mode = #tpu.pipeline_mode<synchronous>, transform_indices = @transform_8, window_bounds = array<i64: 1, 128>}, {pipeline_mode = #tpu.pipeline_mode<synchronous>, transform_indices = @transform_9, window_bounds = array<i64: 128, 128>}, {pipeline_mode = #tpu.pipeline_mode<synchronous>, transform_indices = @transform_10, window_bounds = array<i64: 1, 128>}, {transform_indices = @transform_11, window_bounds = array<i64: 8, 128>}]} {
    %c0 = arith.constant 0 : index
    %c0_0 = arith.constant 0 : index
    %0 = vector.load %arg1[%c0, %c0_0] : memref<8x32xbf16, #tpu.memory_space<vmem>>, vector<8x32xbf16>
    %c0_1 = arith.constant 0 : index
    %c0_2 = arith.constant 0 : index
    %1 = vector.load %arg2[%c0_1, %c0_2] : memref<32x128xbf16, #tpu.memory_space<vmem>>, vector<32x128xbf16>
    %cst = arith.constant dense<0.000000e+00> : vector<8x128xf32>
    %2 = tpu.matmul %0, %1, %cst {dimension_numbers = #tpu.dot_dimension_numbers<[1], [0], [0], [1], [0, 0, 1, 1], [], []>} : vector<8x32xbf16>, vector<32x128xbf16>, vector<8x128xf32> -> vector<8x128xf32>
    %c0_3 = arith.constant 0 : index
    %c0_4 = arith.constant 0 : index
    %3 = vector.load %arg3[%c0_3, %c0_4] : memref<1x128xf32, #tpu.memory_space<vmem>>, vector<1x128xf32>
    %4 = vector.broadcast %3 : vector<1x128xf32> to vector<8x128xf32>
    %5 = arith.addf %2, %4 : vector<8x128xf32>
    %cst_5 = arith.constant 0.000000e+00 : f32
    %6 = vector.broadcast %cst_5 : f32 to vector<8x128xf32>
    %7 = arith.maximumf %5, %6 : vector<8x128xf32>
    %8 = arith.truncf %7 : vector<8x128xf32> to vector<8x128xbf16>
    %c0_6 = arith.constant 0 : index
    %c0_7 = arith.constant 0 : index
    %9 = vector.load %arg4[%c0_6, %c0_7] : memref<128x128xbf16, #tpu.memory_space<vmem>>, vector<128x128xbf16>
    %cst_8 = arith.constant dense<0.000000e+00> : vector<8x128xf32>
    %10 = tpu.matmul %8, %9, %cst_8 {dimension_numbers = #tpu.dot_dimension_numbers<[1], [0], [0], [1], [0, 0, 1, 1], [], []>} : vector<8x128xbf16>, vector<128x128xbf16>, vector<8x128xf32> -> vector<8x128xf32>
    %c0_9 = arith.constant 0 : index
    %c0_10 = arith.constant 0 : index
    %11 = vector.load %arg5[%c0_9, %c0_10] : memref<1x128xf32, #tpu.memory_space<vmem>>, vector<1x128xf32>
    %12 = vector.broadcast %11 : vector<1x128xf32> to vector<8x128xf32>
    %13 = arith.addf %10, %12 : vector<8x128xf32>
    %cst_11 = arith.constant 0.000000e+00 : f32
    %14 = vector.broadcast %cst_11 : f32 to vector<8x128xf32>
    %15 = arith.maximumf %13, %14 : vector<8x128xf32>
    %16 = arith.truncf %15 : vector<8x128xf32> to vector<8x128xbf16>
    %c0_12 = arith.constant 0 : index
    %c0_13 = arith.constant 0 : index
    %17 = vector.load %arg6[%c0_12, %c0_13] : memref<128x128xbf16, #tpu.memory_space<vmem>>, vector<128x128xbf16>
    %cst_14 = arith.constant dense<0.000000e+00> : vector<8x128xf32>
    %18 = tpu.matmul %16, %17, %cst_14 {dimension_numbers = #tpu.dot_dimension_numbers<[1], [0], [0], [1], [0, 0, 1, 1], [], []>} : vector<8x128xbf16>, vector<128x128xbf16>, vector<8x128xf32> -> vector<8x128xf32>
    %c0_15 = arith.constant 0 : index
    %c0_16 = arith.constant 0 : index
    %19 = vector.load %arg7[%c0_15, %c0_16] : memref<1x128xf32, #tpu.memory_space<vmem>>, vector<1x128xf32>
    %20 = vector.broadcast %19 : vector<1x128xf32> to vector<8x128xf32>
    %21 = arith.addf %18, %20 : vector<8x128xf32>
    %cst_17 = arith.constant 0.000000e+00 : f32
    %22 = vector.broadcast %cst_17 : f32 to vector<8x128xf32>
    %23 = arith.maximumf %21, %22 : vector<8x128xf32>
    %24 = arith.truncf %23 : vector<8x128xf32> to vector<8x128xbf16>
    %c0_18 = arith.constant 0 : index
    %c0_19 = arith.constant 0 : index
    %25 = vector.load %arg8[%c0_18, %c0_19] : memref<128x128xbf16, #tpu.memory_space<vmem>>, vector<128x128xbf16>
    %cst_20 = arith.constant dense<0.000000e+00> : vector<8x128xf32>
    %26 = tpu.matmul %24, %25, %cst_20 {dimension_numbers = #tpu.dot_dimension_numbers<[1], [0], [0], [1], [0, 0, 1, 1], [], []>} : vector<8x128xbf16>, vector<128x128xbf16>, vector<8x128xf32> -> vector<8x128xf32>
    %c0_21 = arith.constant 0 : index
    %c0_22 = arith.constant 0 : index
    %27 = vector.load %arg9[%c0_21, %c0_22] : memref<1x128xf32, #tpu.memory_space<vmem>>, vector<1x128xf32>
    %28 = vector.broadcast %27 : vector<1x128xf32> to vector<8x128xf32>
    %29 = arith.addf %26, %28 : vector<8x128xf32>
    %cst_23 = arith.constant 0.000000e+00 : f32
    %30 = vector.broadcast %cst_23 : f32 to vector<8x128xf32>
    %31 = arith.maximumf %29, %30 : vector<8x128xf32>
    %32 = arith.truncf %31 : vector<8x128xf32> to vector<8x128xbf16>
    %c0_24 = arith.constant 0 : index
    %c0_25 = arith.constant 0 : index
    %33 = vector.load %arg10[%c0_24, %c0_25] : memref<128x128xbf16, #tpu.memory_space<vmem>>, vector<128x128xbf16>
    %cst_26 = arith.constant dense<0.000000e+00> : vector<8x128xf32>
    %34 = tpu.matmul %32, %33, %cst_26 {dimension_numbers = #tpu.dot_dimension_numbers<[1], [0], [0], [1], [0, 0, 1, 1], [], []>} : vector<8x128xbf16>, vector<128x128xbf16>, vector<8x128xf32> -> vector<8x128xf32>
    %c0_27 = arith.constant 0 : index
    %c0_28 = arith.constant 0 : index
    %35 = vector.load %arg11[%c0_27, %c0_28] : memref<1x128xf32, #tpu.memory_space<vmem>>, vector<1x128xf32>
    %36 = vector.broadcast %35 : vector<1x128xf32> to vector<8x128xf32>
    %37 = arith.addf %34, %36 : vector<8x128xf32>
    %cst_29 = arith.constant -1.000000e+01 : f32
    %cst_30 = arith.constant 1.000000e+01 : f32
    %38 = vector.broadcast %cst_29 : f32 to vector<8x128xf32>
    %39 = arith.maximumf %38, %37 : vector<8x128xf32>
    %40 = vector.broadcast %cst_30 : f32 to vector<8x128xf32>
    %41 = arith.minimumf %40, %39 : vector<8x128xf32>
    %42 = arith.truncf %41 : vector<8x128xf32> to vector<8x128xbf16>
    %c0_31 = arith.constant 0 : index
    %c0_32 = arith.constant 0 : index
    %43 = vector.load %arg12[%c0_31, %c0_32] : memref<8x128xbf16, #tpu.memory_space<vmem>>, vector<8x128xbf16>
    tpu.vector_store %arg12[%c0_31, %c0_32], %42 {strides = array<i32>} : memref<8x128xbf16, #tpu.memory_space<vmem>>, vector<8x128xbf16>,
    return
  }
  func.func @transform_0(%arg0: i32) -> (i32, i32) {
    %c0_i32 = arith.constant 0 : i32
    %c0_i32_0 = arith.constant 0 : i32
    return %arg0, %c0_i32 : i32, i32
  }
  func.func @transform_1(%arg0: i32) -> (i32, i32) {
    %c0_i32 = arith.constant 0 : i32
    %c0_i32_0 = arith.constant 0 : i32
    %c0_i32_1 = arith.constant 0 : i32
    return %c0_i32, %c0_i32_0 : i32, i32
  }
  func.func @transform_2(%arg0: i32) -> (i32, i32) {
    %c0_i32 = arith.constant 0 : i32
    %c0_i32_0 = arith.constant 0 : i32
    %c0_i32_1 = arith.constant 0 : i32
    return %c0_i32, %c0_i32_0 : i32, i32
  }
  func.func @transform_3(%arg0: i32) -> (i32, i32) {
    %c0_i32 = arith.constant 0 : i32
    %c0_i32_0 = arith.constant 0 : i32
    %c0_i32_1 = arith.constant 0 : i32
    return %c0_i32, %c0_i32_0 : i32, i32
  }
  func.func @transform_4(%arg0: i32) -> (i32, i32) {
    %c0_i32 = arith.constant 0 : i32
    %c0_i32_0 = arith.constant 0 : i32
    %c0_i32_1 = arith.constant 0 : i32
    return %c0_i32, %c0_i32_0 : i32, i32
  }
  func.func @transform_5(%arg0: i32) -> (i32, i32) {
    %c0_i32 = arith.constant 0 : i32
    %c0_i32_0 = arith.constant 0 : i32
    %c0_i32_1 = arith.constant 0 : i32
    return %c0_i32, %c0_i32_0 : i32, i32
  }
  func.func @transform_6(%arg0: i32) -> (i32, i32) {
    %c0_i32 = arith.constant 0 : i32
    %c0_i32_0 = arith.constant 0 : i32
    %c0_i32_1 = arith.constant 0 : i32
    return %c0_i32, %c0_i32_0 : i32, i32
  }
  func.func @transform_7(%arg0: i32) -> (i32, i32) {
    %c0_i32 = arith.constant 0 : i32
    %c0_i32_0 = arith.constant 0 : i32
    %c0_i32_1 = arith.constant 0 : i32
    return %c0_i32, %c0_i32_0 : i32, i32
  }
  func.func @transform_8(%arg0: i32) -> (i32, i32) {
    %c0_i32 = arith.constant 0 : i32
    %c0_i32_0 = arith.constant 0 : i32
    %c0_i32_1 = arith.constant 0 : i32
    return %c0_i32, %c0_i32_0 : i32, i32
  }
  func.func @transform_9(%arg0: i32) -> (i32, i32) {
    %c0_i32 = arith.constant 0 : i32
    %c0_i32_0 = arith.constant 0 : i32
    %c0_i32_1 = arith.constant 0 : i32
    return %c0_i32, %c0_i32_0 : i32, i32
  }
  func.func @transform_10(%arg0: i32) -> (i32, i32) {
    %c0_i32 = arith.constant 0 : i32
    %c0_i32_0 = arith.constant 0 : i32
    %c0_i32_1 = arith.constant 0 : i32
    return %c0_i32, %c0_i32_0 : i32, i32
  }
  func.func @transform_11(%arg0: i32) -> (i32, i32) {
    %c0_i32 = arith.constant 0 : i32
    %c0_i32_0 = arith.constant 0 : i32
    return %arg0, %c0_i32 : i32, i32
  }
}

</mosaic_0001>

<llo_original>
// kernel: tpu_custom_call.1
$region0: #{tpu_custom_call.1}
  #allocation0 [shape = 'u32[]', space=smem, size = 0x4, offset = 0x4, fixed_abs, tag = 'smem constant byte address 0x4 - core index']
  #allocation1 [shape = 'u32[144,128]{1,0:T(1,128)}', space=vmem, size = 0x12000, scoped, tag = 'internal scratch']
  %s0 = inlined_call_operand.hbm [shape: bf16[8,32], index: 0, kind: input, shape index: {}]
  %s1 = inlined_call_operand.hbm [shape: bf16[32,128], index: 1, kind: input, shape index: {}]
  %s2 = inlined_call_operand.vmem [shape: f32[1,128], index: 2, kind: input, shape index: {}]
  %s3 = inlined_call_operand.hbm [shape: bf16[128,128], index: 3, kind: input, shape index: {}]
  %s4 = inlined_call_operand.vmem [shape: f32[1,128], index: 4, kind: input, shape index: {}]
  %s5 = inlined_call_operand.hbm [shape: bf16[128,128], index: 5, kind: input, shape index: {}]
  %s6 = inlined_call_operand.vmem [shape: f32[1,128], index: 6, kind: input, shape index: {}]
  %s7 = inlined_call_operand.hbm [shape: bf16[128,128], index: 7, kind: input, shape index: {}]
  %s8 = inlined_call_operand.vmem [shape: f32[1,128], index: 8, kind: input, shape index: {}]
  %s9 = inlined_call_operand.hbm [shape: bf16[128,128], index: 9, kind: input, shape index: {}]
  %s10 = inlined_call_operand.vmem [shape: f32[1,128], index: 10, kind: input, shape index: {}]
  %s11 = inlined_call_operand.hbm [shape: bf16[8,128], index: 11, kind: output, shape index: {}]
  %s12 = sld [smem:[#allocation0]]
  $region78: #{tpu_custom_call.1} parent=0
    _
  %s14 = ssub.s32 1, %s12
  %s15 = scalar_select 0, %s14, %s12
  $region1: #{tpu_custom_call.1} parent=0
    #allocation2 [shape = 'u8[2048]{0}', space=vmem, size = 0x800, scoped, tag = 'input window, operand 0, single buffered']
    #allocation3 [shape = 's32[1]{0}', space=sflag, size = 0x4, scoped, tag = 'scoped memory for tpu_custom_call.1']
    #allocation4 [shape = 's32[1]{0}', space=sflag, size = 0x4, scoped, tag = 'scoped memory for tpu_custom_call.1']
    #allocation5 [shape = 'u8[8192]{0}', space=vmem, size = 0x2000, scoped, tag = 'input window, operand 1, single buffered']
    #allocation6 [shape = 's32[1]{0}', space=sflag, size = 0x4, scoped, tag = 'scoped memory for tpu_custom_call.1']
    #allocation7 [shape = 'u8[32768]{0}', space=vmem, size = 0x8000, scoped, tag = 'input window, operand 3, single buffered']
    #allocation8 [shape = 'u8[32768]{0}', space=vmem, size = 0x8000, scoped, tag = 'input window, operand 5, single buffered']
    #allocation9 [shape = 's32[1]{0}', space=sflag, size = 0x4, scoped, tag = 'scoped memory for tpu_custom_call.1']
    #allocation10 [shape = 'u8[32768]{0}', space=vmem, size = 0x8000, scoped, tag = 'input window, operand 7, single buffered']
    #allocation11 [shape = 'u8[32768]{0}', space=vmem, size = 0x8000, scoped, tag = 'input window, operand 9, single buffered']
    #allocation12 [shape = 's32[1]{0}', space=sflag, size = 0x4, scoped, tag = 'scoped memory for tpu_custom_call.1']
    #allocation13 [shape = 'u8[2048]{0}', space=vmem, size = 0x800, scoped, tag = 'output window, operand 0, single buffered']
    %16 = vsyncpa [#allocation3], 0
    %17 = vsyncpa [#allocation6], 0
    %18 = vsyncpa [#allocation9], 0
    %19 = vsyncpa [#allocation12], 0
    %20 = vsyncpa [#allocation4], 0
    // Predicated region
    $region2: #{tpu_custom_call.1} parent=1 // pred_check
      _
    $region3: #{tpu_custom_call.1} parent=1 // pred_check_branch
      %22 = sbr.rel (0) target = $region5
    $region4: #{tpu_custom_call.1} parent=1 // pred_region
      %s24 = ssub.s32 64, 64
      %25 = vsyncadd [#allocation3], %s24
      %s27 = sshll.u32 [#allocation2], 4
      %s28 = int_to_ptr.vmem [resolvable:$true] %s27
      %30 = dma.hbm_to_vmem [thread:$0]  %s0, 64, %s28, [#allocation3]
    $region5: #{tpu_custom_call.1} parent=1 // pred_fallthru
      _
    // Predicated region
    $region6: #{tpu_custom_call.1} parent=1 // pred_check
      _
    $region7: #{tpu_custom_call.1} parent=1 // pred_check_branch
      %32 = sbr.rel (0) target = $region9
    $region8: #{tpu_custom_call.1} parent=1 // pred_region
      %s34 = ssub.s32 256, 256
      %35 = vsyncadd [#allocation6], %s34
      %s36 = sshll.u32 [#allocation5], 4
      %s37 = int_to_ptr.vmem [resolvable:$true] %s36
      %42 = dma.hbm_to_vmem [thread:$0]  %s1, 256, %s37, [#allocation6], 64, 64, 4
    $region9: #{tpu_custom_call.1} parent=1 // pred_fallthru
      _
    // Predicated region
    $region10: #{tpu_custom_call.1} parent=1 // pred_check
      _
    $region11: #{tpu_custom_call.1} parent=1 // pred_check_branch
      %44 = sbr.rel (0) target = $region13
    $region12: #{tpu_custom_call.1} parent=1 // pred_region
      _
    $region13: #{tpu_custom_call.1} parent=1 // pred_fallthru
      _
    // Predicated region
    $region14: #{tpu_custom_call.1} parent=1 // pred_check
      _
    $region15: #{tpu_custom_call.1} parent=1 // pred_check_branch
      %46 = sbr.rel (0) target = $region17
    $region16: #{tpu_custom_call.1} parent=1 // pred_region
      %s48 = ssub.s32 1024, 1024
      %49 = vsyncadd [#allocation6], %s48
      %s50 = sshll.u32 [#allocation7], 4
      %s51 = int_to_ptr.vmem [resolvable:$true] %s50
      %56 = dma.hbm_to_vmem [thread:$0]  %s3, 1024, %s51, [#allocation6], 64, 64, 4
    $region17: #{tpu_custom_call.1} parent=1 // pred_fallthru
      _
    // Predicated region
    $region18: #{tpu_custom_call.1} parent=1 // pred_check
      _
    $region19: #{tpu_custom_call.1} parent=1 // pred_check_branch
      %58 = sbr.rel (0) target = $region21
    $region20: #{tpu_custom_call.1} parent=1 // pred_region
      _
    $region21: #{tpu_custom_call.1} parent=1 // pred_fallthru
      _
    // Predicated region
    $region22: #{tpu_custom_call.1} parent=1 // pred_check
      _
    $region23: #{tpu_custom_call.1} parent=1 // pred_check_branch
      %60 = sbr.rel (0) target = $region25
    $region24: #{tpu_custom_call.1} parent=1 // pred_region
      %s62 = ssub.s32 1024, 1024
      %63 = vsyncadd [#allocation9], %s62
      %s64 = sshll.u32 [#allocation8], 4
      %s65 = int_to_ptr.vmem [resolvable:$true] %s64
      %70 = dma.hbm_to_vmem [thread:$0]  %s5, 1024, %s65, [#allocation9], 64, 64, 4
    $region25: #{tpu_custom_call.1} parent=1 // pred_fallthru
      _
    // Predicated region
    $region26: #{tpu_custom_call.1} parent=1 // pred_check
      _
    $region27: #{tpu_custom_call.1} parent=1 // pred_check_branch
      %72 = sbr.rel (0) target = $region29
    $region28: #{tpu_custom_call.1} parent=1 // pred_region
      _
    $region29: #{tpu_custom_call.1} parent=1 // pred_fallthru
      _
    // Predicated region
    $region30: #{tpu_custom_call.1} parent=1 // pred_check
      _
    $region31: #{tpu_custom_call.1} parent=1 // pred_check_branch
      %74 = sbr.rel (0) target = $region33
    $region32: #{tpu_custom_call.1} parent=1 // pred_region
      %s76 = ssub.s32 1024, 1024
      %77 = vsyncadd [#allocation9], %s76
      %s78 = sshll.u32 [#allocation10], 4
      %s79 = int_to_ptr.vmem [resolvable:$true] %s78
      %84 = dma.hbm_to_vmem [thread:$0]  %s7, 1024, %s79, [#allocation9], 64, 64, 4
    $region33: #{tpu_custom_call.1} parent=1 // pred_fallthru
      _
    // Predicated region
    $region34: #{tpu_custom_call.1} parent=1 // pred_check
      _
    $region35: #{tpu_custom_call.1} parent=1 // pred_check_branch
      %86 = sbr.rel (0) target = $region37
    $region36: #{tpu_custom_call.1} parent=1 // pred_region
      _
    $region37: #{tpu_custom_call.1} parent=1 // pred_fallthru
      _
    // Predicated region
    $region38: #{tpu_custom_call.1} parent=1 // pred_check
      _
    $region39: #{tpu_custom_call.1} parent=1 // pred_check_branch
      %88 = sbr.rel (0) target = $region41
    $region40: #{tpu_custom_call.1} parent=1 // pred_region
      %s90 = ssub.s32 1024, 1024
      %91 = vsyncadd [#allocation12], %s90
      %s92 = sshll.u32 [#allocation11], 4
      %s93 = int_to_ptr.vmem [resolvable:$true] %s92
      %98 = dma.hbm_to_vmem [thread:$0]  %s9, 1024, %s93, [#allocation12], 64, 64, 4
    $region41: #{tpu_custom_call.1} parent=1 // pred_fallthru
      _
    // Predicated region
    $region42: #{tpu_custom_call.1} parent=1 // pred_check
      _
    $region43: #{tpu_custom_call.1} parent=1 // pred_check_branch
      %100 = sbr.rel (0) target = $region45
    $region44: #{tpu_custom_call.1} parent=1 // pred_region
      _
    $region45: #{tpu_custom_call.1} parent=1 // pred_fallthru
      _
    // Predicated region
    $region46: #{tpu_custom_call.1} parent=1 // pred_check
      _
    $region47: #{tpu_custom_call.1} parent=1 // pred_check_branch
      %102 = sbr.rel (0) target = $region49
    $region48: #{tpu_custom_call.1} parent=1 // pred_region
      %103 = dma.done [#allocation3], 64
    $region49: #{tpu_custom_call.1} parent=1 // pred_fallthru
      _
    // Predicated region
    $region50: #{tpu_custom_call.1} parent=1 // pred_check
      _
    $region51: #{tpu_custom_call.1} parent=1 // pred_check_branch
      %105 = sbr.rel (0) target = $region53
    $region52: #{tpu_custom_call.1} parent=1 // pred_region
      %106 = dma.done [#allocation6], 256
    $region53: #{tpu_custom_call.1} parent=1 // pred_fallthru
      _
    // Predicated region
    $region54: #{tpu_custom_call.1} parent=1 // pred_check
      _
    $region55: #{tpu_custom_call.1} parent=1 // pred_check_branch
      %108 = sbr.rel (0) target = $region57
    $region56: #{tpu_custom_call.1} parent=1 // pred_region
      %109 = dma.done [#allocation6], 1024
    $region57: #{tpu_custom_call.1} parent=1 // pred_fallthru
      _
    // Predicated region
    $region58: #{tpu_custom_call.1} parent=1 // pred_check
      _
    $region59: #{tpu_custom_call.1} parent=1 // pred_check_branch
      %111 = sbr.rel (0) target = $region61
    $region60: #{tpu_custom_call.1} parent=1 // pred_region
      %112 = dma.done [#allocation9], 1024
    $region61: #{tpu_custom_call.1} parent=1 // pred_fallthru
      _
    // Predicated region
    $region62: #{tpu_custom_call.1} parent=1 // pred_check
      _
    $region63: #{tpu_custom_call.1} parent=1 // pred_check_branch
      %114 = sbr.rel (0) target = $region65
    $region64: #{tpu_custom_call.1} parent=1 // pred_region
      %115 = dma.done [#allocation9], 1024
    $region65: #{tpu_custom_call.1} parent=1 // pred_fallthru
      _
    // Predicated region
    $region66: #{tpu_custom_call.1} parent=1 // pred_check
      _
    $region67: #{tpu_custom_call.1} parent=1 // pred_check_branch
      %117 = sbr.rel (0) target = $region69
    $region68: #{tpu_custom_call.1} parent=1 // pred_region
      %118 = dma.done [#allocation12], 1024
    $region69: #{tpu_custom_call.1} parent=1 // pred_fallthru
      _
    %v120 = vld [vmem:[#allocation2] sm:$0xf]
    %v121 = vld [vmem:[#allocation5] sm:$0xf]
    %v122 = vld [vmem:[#allocation5 + $0x4] sm:$0xf]
    %v123 = vld [vmem:[#allocation5 + $0x8] sm:$0xf]
    %v124 = vld [vmem:[#allocation5 + $0xc] sm:$0xf]
    %v125 = vld [vmem:[%s2] sm:$0x1]
    %v127 = vlaneseq
    %v128 = vshrl.u32 %v127, 7
    %v129 = vsub.s32 0, %v128
    %v130 = vrot.slane %v125, %v129
    %v136 = vunpack.c.l.b16 %v121
    %v137 = vunpack.c.l.b16 %v122
    %v138 = vunpack.c.l.b16 %v123
    %v139 = vunpack.c.l.b16 %v124
    %v140 = vpack.c.b16 %v137, %v136
    %v141 = vpack.c.b16 %v139, %v138
    %vm144 = vcmask 261120
    %v146 = vsel %vm144, %v120, 0
    %148 = vmatprep.subr.bf16.mxu0 0
    %149 = vmatpush1.bf16.msra.mxu0 %v140
    %150 = vmatprep.subr.bf16.mxu0 0
    %151 = vmatpush1.bf16.msra.mxu0 %v141
    %152 = vmatprep.subr.bf16.mxu0 0
    %153 = vmatpush1.bf16.msra.mxu0 0
    %154 = vmatprep.subr.bf16.mxu0 0
    %155 = vmatpush1.bf16.msra.mxu0 0
    %156 = vmatprep.subr.bf16.mxu0 0
    %157 = vmatpush1.bf16.msra.mxu0 0
    %158 = vmatprep.subr.bf16.mxu0 0
    %159 = vmatpush1.bf16.msra.mxu0 0
    %160 = vmatprep.subr.bf16.mxu0 0
    %161 = vmatpush1.bf16.msra.mxu0 0
    %162 = vmatprep.subr.bf16.mxu0 0
    %163 = vmatpush1.bf16.msra.mxu0 0
    %164 = vmatprep.subr.bf16.mxu0 0
    %165 = vmatpush1.bf16.msra.mxu0 0
    %166 = vmatprep.subr.bf16.mxu0 0
    %167 = vmatpush1.bf16.msra.mxu0 0
    %168 = vmatprep.subr.bf16.mxu0 0
    %169 = vmatpush1.bf16.msra.mxu0 0
    %170 = vmatprep.subr.bf16.mxu0 0
    %171 = vmatpush1.bf16.msra.mxu0 0
    %172 = vmatprep.subr.bf16.mxu0 0
    %173 = vmatpush1.bf16.msra.mxu0 0
    %174 = vmatprep.subr.bf16.mxu0 0
    %175 = vmatpush1.bf16.msra.mxu0 0
    %176 = vmatprep.subr.bf16.mxu0 0
    %177 = vmatpush1.bf16.msra.mxu0 0
    %178 = vmatprep.subr.bf16.mxu0 0
    %179 = vmatpush1.bf16.msra.mxu0 0
    %180 = vmatprep.mubr.bf16.mxu0 0
    %181 = vmatmul.mubr.bf16.gmra.mrb[0].mxu0 %v146
    %v182 = vpop.f32.mrb[0].mxu0
    %v183 = vadd.f32 %v130, %v182
    %v184 = vpop.f32.mrb[0].mxu0
    %v185 = vpop.f32.mrb[0].mxu0
    %v186 = vpop.f32.mrb[0].mxu0
    %187 = vdwg.mxu0
    %v188 = vmax.f32 %v183, 0.0
    %v189 = vpack.c.bf16 %v188, %v188
    %v190 = vld [vmem:[#allocation7] sm:$0xf]
    %v191 = vld [vmem:[#allocation7 + $0x4] sm:$0xf]
    %v192 = vld [vmem:[#allocation7 + $0x8] sm:$0xf]
    %v193 = vld [vmem:[#allocation7 + $0xc] sm:$0xf]
    %v194 = vld [vmem:[#allocation7 + $0x10] sm:$0xf]
    %v195 = vld [vmem:[#allocation7 + $0x14] sm:$0xf]
    %v196 = vld [vmem:[#allocation7 + $0x18] sm:$0xf]
    %v197 = vld [vmem:[#allocation7 + $0x1c] sm:$0xf]
    %v198 = vld [vmem:[#allocation7 + $0x20] sm:$0xf]
    %v199 = vld [vmem:[#allocation7 + $0x24] sm:$0xf]
    %v200 = vld [vmem:[#allocation7 + $0x28] sm:$0xf]
    %v201 = vld [vmem:[#allocation7 + $0x2c] sm:$0xf]
    %v202 = vld [vmem:[#allocation7 + $0x30] sm:$0xf]
    %v203 = vld [vmem:[#allocation7 + $0x34] sm:$0xf]
    %v204 = vld [vmem:[#allocation7 + $0x38] sm:$0xf]
    %v205 = vld [vmem:[#allocation7 + $0x3c] sm:$0xf]
    %v206 = vld [vmem:[%s4] sm:$0x1]
    %v208 = vlaneseq
    %v209 = vshrl.u32 %v208, 7
    %v210 = vsub.s32 0, %v209
    %v211 = vrot.slane %v206, %v210
    %v229 = vunpack.c.l.b16 %v190
    %v230 = vunpack.c.l.b16 %v191
    %v231 = vunpack.c.l.b16 %v192
    %v232 = vunpack.c.l.b16 %v193
    %v233 = vunpack.c.l.b16 %v194
    %v234 = vunpack.c.l.b16 %v195
    %v235 = vunpack.c.l.b16 %v196
    %v236 = vunpack.c.l.b16 %v197
    %v237 = vunpack.c.l.b16 %v198
    %v238 = vunpack.c.l.b16 %v199
    %v239 = vunpack.c.l.b16 %v200
    %v240 = vunpack.c.l.b16 %v201
    %v241 = vunpack.c.l.b16 %v202
    %v242 = vunpack.c.l.b16 %v203
    %v243 = vunpack.c.l.b16 %v204
    %v244 = vunpack.c.l.b16 %v205
    %v245 = vpack.c.b16 %v230, %v229
    %v246 = vpack.c.b16 %v232, %v231
    %v247 = vpack.c.b16 %v234, %v233
    %v248 = vpack.c.b16 %v236, %v235
    %v249 = vpack.c.b16 %v238, %v237
    %v250 = vpack.c.b16 %v240, %v239
    %v251 = vpack.c.b16 %v242, %v241
    %v252 = vpack.c.b16 %v244, %v243
    %261 = vmatprep.subr.bf16.mxu0 0
    %262 = vmatpush1.bf16.msra.mxu0 %v245
    %263 = vmatprep.subr.bf16.mxu0 0
    %264 = vmatpush1.bf16.msra.mxu0 %v246
    %265 = vmatprep.subr.bf16.mxu0 0
    %266 = vmatpush1.bf16.msra.mxu0 %v247
    %267 = vmatprep.subr.bf16.mxu0 0
    %268 = vmatpush1.bf16.msra.mxu0 %v248
    %269 = vmatprep.subr.bf16.mxu0 0
    %270 = vmatpush1.bf16.msra.mxu0 %v249
    %271 = vmatprep.subr.bf16.mxu0 0
    %272 = vmatpush1.bf16.msra.mxu0 %v250
    %273 = vmatprep.subr.bf16.mxu0 0
    %274 = vmatpush1.bf16.msra.mxu0 %v251
    %275 = vmatprep.subr.bf16.mxu0 0
    %276 = vmatpush1.bf16.msra.mxu0 %v252
    %277 = vmatprep.subr.bf16.mxu0 0
    %278 = vmatpush1.bf16.msra.mxu0 0
    %279 = vmatprep.subr.bf16.mxu0 0
    %280 = vmatpush1.bf16.msra.mxu0 0
    %281 = vmatprep.subr.bf16.mxu0 0
    %282 = vmatpush1.bf16.msra.mxu0 0
    %283 = vmatprep.subr.bf16.mxu0 0
    %284 = vmatpush1.bf16.msra.mxu0 0
    %285 = vmatprep.subr.bf16.mxu0 0
    %286 = vmatpush1.bf16.msra.mxu0 0
    %287 = vmatprep.subr.bf16.mxu0 0
    %288 = vmatpush1.bf16.msra.mxu0 0
    %289 = vmatprep.subr.bf16.mxu0 0
    %290 = vmatpush1.bf16.msra.mxu0 0
    %291 = vmatprep.subr.bf16.mxu0 0
    %292 = vmatpush1.bf16.msra.mxu0 0
    %293 = vmatprep.mubr.bf16.mxu0 0
    %294 = vmatmul.mubr.bf16.gmra.mrb[0].mxu0 %v189
    %v295 = vpop.f32.mrb[0].mxu0
    %v296 = vadd.f32 %v211, %v295
    %v297 = vpop.f32.mrb[0].mxu0
    %v298 = vpop.f32.mrb[0].mxu0
    %v299 = vpop.f32.mrb[0].mxu0
    %300 = vdwg.mxu0
    %v301 = vmax.f32 %v296, 0.0
    %v302 = vpack.c.bf16 %v301, %v301
    %v303 = vld [vmem:[#allocation8] sm:$0xf]
    %v304 = vld [vmem:[#allocation8 + $0x4] sm:$0xf]
    %v305 = vld [vmem:[#allocation8 + $0x8] sm:$0xf]
    %v306 = vld [vmem:[#allocation8 + $0xc] sm:$0xf]
    %v307 = vld [vmem:[#allocation8 + $0x10] sm:$0xf]
    %v308 = vld [vmem:[#allocation8 + $0x14] sm:$0xf]
    %v309 = vld [vmem:[#allocation8 + $0x18] sm:$0xf]
    %v310 = vld [vmem:[#allocation8 + $0x1c] sm:$0xf]
    %v311 = vld [vmem:[#allocation8 + $0x20] sm:$0xf]
    %v312 = vld [vmem:[#allocation8 + $0x24] sm:$0xf]
    %v313 = vld [vmem:[#allocation8 + $0x28] sm:$0xf]
    %v314 = vld [vmem:[#allocation8 + $0x2c] sm:$0xf]
    %v315 = vld [vmem:[#allocation8 + $0x30] sm:$0xf]
    %v316 = vld [vmem:[#allocation8 + $0x34] sm:$0xf]
    %v317 = vld [vmem:[#allocation8 + $0x38] sm:$0xf]
    %v318 = vld [vmem:[#allocation8 + $0x3c] sm:$0xf]
    %v319 = vld [vmem:[%s6] sm:$0x1]
    %v321 = vlaneseq
    %v322 = vshrl.u32 %v321, 7
    %v323 = vsub.s32 0, %v322
    %v324 = vrot.slane %v319, %v323
    %v342 = vunpack.c.l.b16 %v303
    %v343 = vunpack.c.l.b16 %v304
    %v344 = vunpack.c.l.b16 %v305
    %v345 = vunpack.c.l.b16 %v306
    %v346 = vunpack.c.l.b16 %v307
    %v347 = vunpack.c.l.b16 %v308
    %v348 = vunpack.c.l.b16 %v309
    %v349 = vunpack.c.l.b16 %v310
    %v350 = vunpack.c.l.b16 %v311
    %v351 = vunpack.c.l.b16 %v312
    %v352 = vunpack.c.l.b16 %v313
    %v353 = vunpack.c.l.b16 %v314
    %v354 = vunpack.c.l.b16 %v315
    %v355 = vunpack.c.l.b16 %v316
    %v356 = vunpack.c.l.b16 %v317
    %v357 = vunpack.c.l.b16 %v318
    %v358 = vpack.c.b16 %v343, %v342
    %v359 = vpack.c.b16 %v345, %v344
    %v360 = vpack.c.b16 %v347, %v346
    %v361 = vpack.c.b16 %v349, %v348
    %v362 = vpack.c.b16 %v351, %v350
    %v363 = vpack.c.b16 %v353, %v352
    %v364 = vpack.c.b16 %v355, %v354
    %v365 = vpack.c.b16 %v357, %v356
    %374 = vmatprep.subr.bf16.mxu0 0
    %375 = vmatpush1.bf16.msra.mxu0 %v358
    %376 = vmatprep.subr.bf16.mxu0 0
    %377 = vmatpush1.bf16.msra.mxu0 %v359
    %378 = vmatprep.subr.bf16.mxu0 0
    %379 = vmatpush1.bf16.msra.mxu0 %v360
    %380 = vmatprep.subr.bf16.mxu0 0
    %381 = vmatpush1.bf16.msra.mxu0 %v361
    %382 = vmatprep.subr.bf16.mxu0 0
    %383 = vmatpush1.bf16.msra.mxu0 %v362
    %384 = vmatprep.subr.bf16.mxu0 0
    %385 = vmatpush1.bf16.msra.mxu0 %v363
    %386 = vmatprep.subr.bf16.mxu0 0
    %387 = vmatpush1.bf16.msra.mxu0 %v364
    %388 = vmatprep.subr.bf16.mxu0 0
    %389 = vmatpush1.bf16.msra.mxu0 %v365
    %390 = vmatprep.subr.bf16.mxu0 0
    %391 = vmatpush1.bf16.msra.mxu0 0
    %392 = vmatprep.subr.bf16.mxu0 0
    %393 = vmatpush1.bf16.msra.mxu0 0
    %394 = vmatprep.subr.bf16.mxu0 0
    %395 = vmatpush1.bf16.msra.mxu0 0
    %396 = vmatprep.subr.bf16.mxu0 0
    %397 = vmatpush1.bf16.msra.mxu0 0
    %398 = vmatprep.subr.bf16.mxu0 0
    %399 = vmatpush1.bf16.msra.mxu0 0
    %400 = vmatprep.subr.bf16.mxu0 0
    %401 = vmatpush1.bf16.msra.mxu0 0
    %402 = vmatprep.subr.bf16.mxu0 0
    %403 = vmatpush1.bf16.msra.mxu0 0
    %404 = vmatprep.subr.bf16.mxu0 0
    %405 = vmatpush1.bf16.msra.mxu0 0
    %406 = vmatprep.mubr.bf16.mxu0 0
    %407 = vmatmul.mubr.bf16.gmra.mrb[0].mxu0 %v302
    %v408 = vpop.f32.mrb[0].mxu0
    %v409 = vadd.f32 %v324, %v408
    %v410 = vpop.f32.mrb[0].mxu0
    %v411 = vpop.f32.mrb[0].mxu0
    %v412 = vpop.f32.mrb[0].mxu0
    %413 = vdwg.mxu0
    %v414 = vmax.f32 %v409, 0.0
    %v415 = vpack.c.bf16 %v414, %v414
    %v416 = vld [vmem:[#allocation10] sm:$0xf]
    %v417 = vld [vmem:[#allocation10 + $0x4] sm:$0xf]
    %v418 = vld [vmem:[#allocation10 + $0x8] sm:$0xf]
    %v419 = vld [vmem:[#allocation10 + $0xc] sm:$0xf]
    %v420 = vld [vmem:[#allocation10 + $0x10] sm:$0xf]
    %v421 = vld [vmem:[#allocation10 + $0x14] sm:$0xf]
    %v422 = vld [vmem:[#allocation10 + $0x18] sm:$0xf]
    %v423 = vld [vmem:[#allocation10 + $0x1c] sm:$0xf]
    %v424 = vld [vmem:[#allocation10 + $0x20] sm:$0xf]
    %v425 = vld [vmem:[#allocation10 + $0x24] sm:$0xf]
    %v426 = vld [vmem:[#allocation10 + $0x28] sm:$0xf]
    %v427 = vld [vmem:[#allocation10 + $0x2c] sm:$0xf]
    %v428 = vld [vmem:[#allocation10 + $0x30] sm:$0xf]
    %v429 = vld [vmem:[#allocation10 + $0x34] sm:$0xf]
    %v430 = vld [vmem:[#allocation10 + $0x38] sm:$0xf]
    %v431 = vld [vmem:[#allocation10 + $0x3c] sm:$0xf]
    %v432 = vld [vmem:[%s8] sm:$0x1]
    %v434 = vlaneseq
    %v435 = vshrl.u32 %v434, 7
    %v436 = vsub.s32 0, %v435
    %v437 = vrot.slane %v432, %v436
    %v455 = vunpack.c.l.b16 %v416
    %v456 = vunpack.c.l.b16 %v417
    %v457 = vunpack.c.l.b16 %v418
    %v458 = vunpack.c.l.b16 %v419
    %v459 = vunpack.c.l.b16 %v420
    %v460 = vunpack.c.l.b16 %v421
    %v461 = vunpack.c.l.b16 %v422
    %v462 = vunpack.c.l.b16 %v423
    %v463 = vunpack.c.l.b16 %v424
    %v464 = vunpack.c.l.b16 %v425
    %v465 = vunpack.c.l.b16 %v426
    %v466 = vunpack.c.l.b16 %v427
    %v467 = vunpack.c.l.b16 %v428
    %v468 = vunpack.c.l.b16 %v429
    %v469 = vunpack.c.l.b16 %v430
    %v470 = vunpack.c.l.b16 %v431
    %v471 = vpack.c.b16 %v456, %v455
    %v472 = vpack.c.b16 %v458, %v457
    %v473 = vpack.c.b16 %v460, %v459
    %v474 = vpack.c.b16 %v462, %v461
    %v475 = vpack.c.b16 %v464, %v463
    %v476 = vpack.c.b16 %v466, %v465
    %v477 = vpack.c.b16 %v468, %v467
    %v478 = vpack.c.b16 %v470, %v469
    %487 = vmatprep.subr.bf16.mxu0 0
    %488 = vmatpush1.bf16.msra.mxu0 %v471
    %489 = vmatprep.subr.bf16.mxu0 0
    %490 = vmatpush1.bf16.msra.mxu0 %v472
    %491 = vmatprep.subr.bf16.mxu0 0
    %492 = vmatpush1.bf16.msra.mxu0 %v473
    %493 = vmatprep.subr.bf16.mxu0 0
    %494 = vmatpush1.bf16.msra.mxu0 %v474
    %495 = vmatprep.subr.bf16.mxu0 0
    %496 = vmatpush1.bf16.msra.mxu0 %v475
    %497 = vmatprep.subr.bf16.mxu0 0
    %498 = vmatpush1.bf16.msra.mxu0 %v476
    %499 = vmatprep.subr.bf16.mxu0 0
    %500 = vmatpush1.bf16.msra.mxu0 %v477
    %501 = vmatprep.subr.bf16.mxu0 0
    %502 = vmatpush1.bf16.msra.mxu0 %v478
    %503 = vmatprep.subr.bf16.mxu0 0
    %504 = vmatpush1.bf16.msra.mxu0 0
    %505 = vmatprep.subr.bf16.mxu0 0
    %506 = vmatpush1.bf16.msra.mxu0 0
    %507 = vmatprep.subr.bf16.mxu0 0
    %508 = vmatpush1.bf16.msra.mxu0 0
    %509 = vmatprep.subr.bf16.mxu0 0
    %510 = vmatpush1.bf16.msra.mxu0 0
    %511 = vmatprep.subr.bf16.mxu0 0
    %512 = vmatpush1.bf16.msra.mxu0 0
    %513 = vmatprep.subr.bf16.mxu0 0
    %514 = vmatpush1.bf16.msra.mxu0 0
    %515 = vmatprep.subr.bf16.mxu0 0
    %516 = vmatpush1.bf16.msra.mxu0 0
    %517 = vmatprep.subr.bf16.mxu0 0
    %518 = vmatpush1.bf16.msra.mxu0 0
    %519 = vmatprep.mubr.bf16.mxu0 0
    %520 = vmatmul.mubr.bf16.gmra.mrb[0].mxu0 %v415
    %v521 = vpop.f32.mrb[0].mxu0
    %v522 = vadd.f32 %v437, %v521
    %v523 = vpop.f32.mrb[0].mxu0
    %v524 = vpop.f32.mrb[0].mxu0
    %v525 = vpop.f32.mrb[0].mxu0
    %526 = vdwg.mxu0
    %v527 = vmax.f32 %v522, 0.0
    %v528 = vpack.c.bf16 %v527, %v527
    %v529 = vld [vmem:[#allocation11] sm:$0xf]
    %v530 = vld [vmem:[#allocation11 + $0x4] sm:$0xf]
    %v531 = vld [vmem:[#allocation11 + $0x8] sm:$0xf]
    %v532 = vld [vmem:[#allocation11 + $0xc] sm:$0xf]
    %v533 = vld [vmem:[#allocation11 + $0x10] sm:$0xf]
    %v534 = vld [vmem:[#allocation11 + $0x14] sm:$0xf]
    %v535 = vld [vmem:[#allocation11 + $0x18] sm:$0xf]
    %v536 = vld [vmem:[#allocation11 + $0x1c] sm:$0xf]
    %v537 = vld [vmem:[#allocation11 + $0x20] sm:$0xf]
    %v538 = vld [vmem:[#allocation11 + $0x24] sm:$0xf]
    %v539 = vld [vmem:[#allocation11 + $0x28] sm:$0xf]
    %v540 = vld [vmem:[#allocation11 + $0x2c] sm:$0xf]
    %v541 = vld [vmem:[#allocation11 + $0x30] sm:$0xf]
    %v542 = vld [vmem:[#allocation11 + $0x34] sm:$0xf]
    %v543 = vld [vmem:[#allocation11 + $0x38] sm:$0xf]
    %v544 = vld [vmem:[#allocation11 + $0x3c] sm:$0xf]
    %v545 = vld [vmem:[%s10] sm:$0x1]
    %v547 = vlaneseq
    %v548 = vshrl.u32 %v547, 7
    %v549 = vsub.s32 0, %v548
    %v550 = vrot.slane %v545, %v549
    %v568 = vunpack.c.l.b16 %v529
    %v569 = vunpack.c.l.b16 %v530
    %v570 = vunpack.c.l.b16 %v531
    %v571 = vunpack.c.l.b16 %v532
    %v572 = vunpack.c.l.b16 %v533
    %v573 = vunpack.c.l.b16 %v534
    %v574 = vunpack.c.l.b16 %v535
    %v575 = vunpack.c.l.b16 %v536
    %v576 = vunpack.c.l.b16 %v537
    %v577 = vunpack.c.l.b16 %v538
    %v578 = vunpack.c.l.b16 %v539
    %v579 = vunpack.c.l.b16 %v540
    %v580 = vunpack.c.l.b16 %v541
    %v581 = vunpack.c.l.b16 %v542
    %v582 = vunpack.c.l.b16 %v543
    %v583 = vunpack.c.l.b16 %v544
    %v584 = vpack.c.b16 %v569, %v568
    %v585 = vpack.c.b16 %v571, %v570
    %v586 = vpack.c.b16 %v573, %v572
    %v587 = vpack.c.b16 %v575, %v574
    %v588 = vpack.c.b16 %v577, %v576
    %v589 = vpack.c.b16 %v579, %v578
    %v590 = vpack.c.b16 %v581, %v580
    %v591 = vpack.c.b16 %v583, %v582
    %600 = vmatprep.subr.bf16.mxu0 0
    %601 = vmatpush1.bf16.msra.mxu0 %v584
    %602 = vmatprep.subr.bf16.mxu0 0
    %603 = vmatpush1.bf16.msra.mxu0 %v585
    %604 = vmatprep.subr.bf16.mxu0 0
    %605 = vmatpush1.bf16.msra.mxu0 %v586
    %606 = vmatprep.subr.bf16.mxu0 0
    %607 = vmatpush1.bf16.msra.mxu0 %v587
    %608 = vmatprep.subr.bf16.mxu0 0
    %609 = vmatpush1.bf16.msra.mxu0 %v588
    %610 = vmatprep.subr.bf16.mxu0 0
    %611 = vmatpush1.bf16.msra.mxu0 %v589
    %612 = vmatprep.subr.bf16.mxu0 0
    %613 = vmatpush1.bf16.msra.mxu0 %v590
    %614 = vmatprep.subr.bf16.mxu0 0
    %615 = vmatpush1.bf16.msra.mxu0 %v591
    %616 = vmatprep.subr.bf16.mxu0 0
    %617 = vmatpush1.bf16.msra.mxu0 0
    %618 = vmatprep.subr.bf16.mxu0 0
    %619 = vmatpush1.bf16.msra.mxu0 0
    %620 = vmatprep.subr.bf16.mxu0 0
    %621 = vmatpush1.bf16.msra.mxu0 0
    %622 = vmatprep.subr.bf16.mxu0 0
    %623 = vmatpush1.bf16.msra.mxu0 0
    %624 = vmatprep.subr.bf16.mxu0 0
    %625 = vmatpush1.bf16.msra.mxu0 0
    %626 = vmatprep.subr.bf16.mxu0 0
    %627 = vmatpush1.bf16.msra.mxu0 0
    %628 = vmatprep.subr.bf16.mxu0 0
    %629 = vmatpush1.bf16.msra.mxu0 0
    %630 = vmatprep.subr.bf16.mxu0 0
    %631 = vmatpush1.bf16.msra.mxu0 0
    %632 = vmatprep.mubr.bf16.mxu0 0
    %633 = vmatmul.mubr.bf16.gmra.mrb[0].mxu0 %v528
    %v634 = vpop.f32.mrb[0].mxu0
    %v635 = vadd.f32 %v550, %v634
    %v636 = vpop.f32.mrb[0].mxu0
    %v637 = vpop.f32.mrb[0].mxu0
    %v638 = vpop.f32.mrb[0].mxu0
    %639 = vdwg.mxu0
    %v640 = vmax.f32 %v635, -10.0
    %v641 = vmin.f32 %v640, 10.0
    %v642 = vpack.c.bf16 %v641, %v641
    %643 = vst [vmem:[#allocation13] sm:$0xf] %v642
    // Predicated region
    $region70: #{tpu_custom_call.1} parent=1 // pred_check
      _
    $region71: #{tpu_custom_call.1} parent=1 // pred_check_branch
      %645 = sbr.rel (0) target = $region73
    $region72: #{tpu_custom_call.1} parent=1 // pred_region
      %s647 = ssub.s32 64, 64
      %648 = vsyncadd [#allocation4], %s647
      %s650 = sshll.u32 [#allocation13], 4
      %s651 = int_to_ptr.vmem [resolvable:$true] %s650
      %653 = dma.vmem_to_hbm [thread:$0]  %s651, 64, %s11, [#allocation4]
    $region73: #{tpu_custom_call.1} parent=1 // pred_fallthru
      _
    // Predicated region
    $region74: #{tpu_custom_call.1} parent=1 // pred_check
      _
    $region75: #{tpu_custom_call.1} parent=1 // pred_check_branch
      %655 = sbr.rel (0) target = $region77
    $region76: #{tpu_custom_call.1} parent=1 // pred_region
      %656 = dma.done [#allocation4], 64
    $region77: #{tpu_custom_call.1} parent=1 // pred_fallthru
      _
    %657 = vsyncpa [#allocation3], 1
    %658 = vsyncpa [#allocation6], 1
    %659 = vsyncpa [#allocation9], 1
    %660 = vsyncpa [#allocation12], 1
    %661 = vsyncpa [#allocation4], 1

</llo_original>
